<compile_context>
chip_gen: v5e
topology: v5e:2x2
jax: 0.10.0
libtpu: 0.0.40
codegen_flags: <defaults>
</compile_context>

<pallas_src>
import math

import jax
import jax.numpy as jnp
from jax import lax
from jax.experimental import pallas as pl
from jax.experimental.pallas import tpu as pltpu

# ----------------------------- config (small) -------------------------------
HIDDEN = 32
NUM_HEADS = 4
NUM_KV_HEADS = 2
HEAD_DIM = HIDDEN // NUM_HEADS            # 8
Q_SIZE = NUM_HEADS * HEAD_DIM             # 32
KV_SIZE = NUM_KV_HEADS * HEAD_DIM         # 16
QK_SIZE = Q_SIZE + KV_SIZE                # 48
PARTIAL_ROTARY_FACTOR = 0.5               # Nemotron default
ROTARY_DIM = int(HEAD_DIM * PARTIAL_ROTARY_FACTOR)   # 4
HALF_ROT = ROTARY_DIM // 2                # 2
ROPE_THETA = 10000.0
SCALING = HEAD_DIM ** -0.5
SEQ = 8

# Mirrors `MSCALE = os.getenv('MSCALE')` in the reference module; default None.
MSCALE = None


# ------------------------------ fused kernel --------------------------------
def _rotate_lanes(x, shift):
    """Cyclic lane rotation used for rotate_half.

    On vreg-aligned widths (multiple of 128 lanes, i.e. real head_dim) this is
    a pltpu.roll (XLU slot, no MXU push).  At the toy 48-lane width we fall
    back to the slice+concat form (jnp.roll with a static shift), which always
    lowers.  The static Python branch is resolved at trace time.
    """
    w = x.shape[-1]
    if w % 128 == 0:
        return pltpu.roll(x, shift=shift % w, axis=-1)
    return jnp.roll(x, shift, axis=-1)


def _fused_attn_kernel(hs_ref, wqkv_ref, wo_ref,
                       cos_ref, sina_ref, sinb_ref, bias_ref, o_ref):
    # --- qkv projection (single MXU matmul, stays in VMEM/vregs) ---
    qkv = jnp.dot(hs_ref[...], wqkv_ref[...],
                  preferred_element_type=jnp.float32)          # (T, Q+2*KV)
    qk = qkv[:, :QK_SIZE]                                      # joint q|k slab
    v = qkv[:, QK_SIZE:]                                       # (T, KV_SIZE)

    # --- NeoX partial RoPE on the joint q|k slab ---
    # rope(x) = x*cos + roll(x,-half)*sin_a + roll(x,+half)*sin_b
    # sin_a is -sin on x1 lanes (0 elsewhere), sin_b is +sin on x2 lanes
    # (0 elsewhere), cos is 1 on pass-through lanes.  Softmax scale and MSCALE
    # are pre-folded into the q lanes of these tables (row scaling commutes
    # with RoPE), so q arrives already scaled for the score matmul.
    qk = (qk * cos_ref[...]
          + _rotate_lanes(qk, -HALF_ROT) * sina_ref[...]
          + _rotate_lanes(qk, HALF_ROT) * sinb_ref[...])

    q = qk[:, :Q_SIZE]
    k = qk[:, Q_SIZE:]
    wo = wo_ref[...]                                           # (Q_SIZE, HIDDEN)
    bias = bias_ref[...]                                       # (T, T) additive causal

    # --- causal GQA attention with o_proj fused into the head loop ---
    group = NUM_HEADS // NUM_KV_HEADS
    acc = jnp.zeros(o_ref.shape, jnp.float32)                  # (T, HIDDEN)
    for h in range(NUM_HEADS):                                 # static tiny loop
        qh = q[:, h * HEAD_DIM:(h + 1) * HEAD_DIM]             # (T, D)
        kv_h = h // group
        kh = k[:, kv_h * HEAD_DIM:(kv_h + 1) * HEAD_DIM]       # (T, D)
        vh = v[:, kv_h * HEAD_DIM:(kv_h + 1) * HEAD_DIM]       # (T, D)
        # s = q @ k^T without materializing k^T (contract last dims).
        s = lax.dot_general(qh, kh, (((1,), (1,)), ((), ())),
                            preferred_element_type=jnp.float32) + bias   # (T, T)
        m = jnp.max(s, axis=-1, keepdims=True)
        p = jnp.exp(s - m)
        l = jnp.sum(p, axis=-1, keepdims=True)
        oh = jnp.dot(p, vh, preferred_element_type=jnp.float32)          # (T, D)
        oh = oh * pl.reciprocal(l, approx=True)                # EUP slot
        # Fused o_proj: accumulate this head's contribution into the
        # lane-dense (T, HIDDEN) slab (no concat, no narrow stores).
        acc = acc + jnp.dot(oh, wo[h * HEAD_DIM:(h + 1) * HEAD_DIM, :],
                            preferred_element_type=jnp.float32)

    o_ref[...] = acc                                           # one lane-dense store


# --------------------------- host-side table build --------------------------
def _mscale_factors(T):
    """Per-token multiplier implementing apply_mscale_if_needed (host-side)."""
    if MSCALE is None:
        return None
    try:
        return jnp.full((T,), float(MSCALE), jnp.float32)      # static float
    except (TypeError, ValueError):
        pass
    ms = str(MSCALE).strip().lower()
    idx = jnp.arange(T, dtype=jnp.float32)
    if ms == 'log':
        return jnp.where(idx == 0, 1.0, jnp.log(idx + 1.0))
    if ms.startswith('log'):
        try:
            base = float(ms[3:])
        except (TypeError, ValueError):
            return None
        return jnp.log(base + idx) / math.log(base)
    return None                                                # unsupported -> no scaling


def build_rope_tables(positions, q_row_scale):
    """cos / sin_a / sin_b tables of width Q_SIZE+KV_SIZE so NeoX partial RoPE
    is x*cos + roll(x,-half)*sin_a + roll(x,+half)*sin_b in-kernel.  The
    per-token q scale (softmax scale * mscale) is folded into the q lanes."""
    T = positions.shape[0]
    pass_w = HEAD_DIM - ROTARY_DIM
    inv_freq = 1.0 / (ROPE_THETA ** (
        jnp.arange(0, ROTARY_DIM, 2, dtype=jnp.float32) / ROTARY_DIM))
    ang = positions.astype(jnp.float32)[:, None] * inv_freq[None, :]   # (T, half)
    cos, sin = jnp.cos(ang), jnp.sin(ang)
    z_half = jnp.zeros((T, HALF_ROT), jnp.float32)
    z_pass = jnp.zeros((T, pass_w), jnp.float32)
    one_pass = jnp.ones((T, pass_w), jnp.float32)

    cos_head = jnp.concatenate([cos, cos, one_pass], axis=-1)           # (T, D)
    sina_head = jnp.concatenate([-sin, z_half, z_pass], axis=-1)        # x1 lanes
    sinb_head = jnp.concatenate([z_half, sin, z_pass], axis=-1)         # x2 lanes

    n_heads = NUM_HEADS + NUM_KV_HEADS
    cos_t = jnp.tile(cos_head, (1, n_heads))
    sina_t = jnp.tile(sina_head, (1, n_heads))
    sinb_t = jnp.tile(sinb_head, (1, n_heads))

    row_scale = jnp.concatenate(
        [jnp.tile(q_row_scale[:, None], (1, Q_SIZE)),
         jnp.ones((T, KV_SIZE), jnp.float32)], axis=-1)
    return cos_t * row_scale, sina_t * row_scale, sinb_t * row_scale


# ------------------------------ forward pass --------------------------------
@jax.jit
def nemotron_attention_forward(positions, hidden_states, w_qkv, w_o):
    T = hidden_states.shape[0]

    # Fold softmax scaling (and MSCALE, static or dynamic) into the per-token
    # q scale; RoPE is linear in x so scaling before rotation == scaling scores.
    sf = _mscale_factors(T)
    q_row_scale = jnp.full((T,), SCALING, jnp.float32)
    if sf is not None:
        q_row_scale = q_row_scale * sf

    cos_t, sina_t, sinb_t = build_rope_tables(positions, q_row_scale)

    # Precomputed additive causal bias (0 on/below diagonal, -1e30 above).
    row = jnp.arange(T, dtype=jnp.int32)[:, None]
    col = jnp.arange(T, dtype=jnp.int32)[None, :]
    causal_bias = jnp.where(col <= row, 0.0, -1e30).astype(jnp.float32)

    # Single gridless pallas_call: every operand is one whole VMEM block
    # (all tensors are a few KB), one launch for the entire forward.
    # TODO(synk): at real sizes add a (parallel q-tile, arbitrary kv-tile) grid
    #             so v7x's second TensorCore is used and VMEM stays bounded.
    vmem = pl.BlockSpec(memory_space=pltpu.MemorySpace.VMEM)
    return pl.pallas_call(
        _fused_attn_kernel,
        out_shape=jax.ShapeDtypeStruct((T, HIDDEN), jnp.float32),
        in_specs=[vmem] * 7,
        out_specs=vmem,
    )(hidden_states, w_qkv, w_o, cos_t, sina_t, sinb_t, causal_bias)


# ---------------------------- pure-JAX reference ----------------------------
def _ref_rope(x, positions):
    half = ROTARY_DIM // 2
    inv_freq = 1.0 / (ROPE_THETA ** (
        jnp.arange(0, ROTARY_DIM, 2, dtype=jnp.float32) / ROTARY_DIM))
    ang = positions.astype(jnp.float32)[:, None] * inv_freq[None, :]
    cos = jnp.cos(ang)[:, None, :]
    sin = jnp.sin(ang)[:, None, :]
    x_rot, x_pass = x[..., :ROTARY_DIM], x[..., ROTARY_DIM:]
    x1, x2 = x_rot[..., :half], x_rot[..., half:]
    return jnp.concatenate([x1 * cos - x2 * sin,
                            x2 * cos + x1 * sin,
                            x_pass], axis=-1)


def reference(positions, hs, w_qkv, w_o):
    T = hs.shape[0]
    qkv = hs @ w_qkv
    q = qkv[:, :Q_SIZE].reshape(T, NUM_HEADS, HEAD_DIM)
    k = qkv[:, Q_SIZE:Q_SIZE + KV_SIZE].reshape(T, NUM_KV_HEADS, HEAD_DIM)
    v = qkv[:, Q_SIZE + KV_SIZE:].reshape(T, NUM_KV_HEADS, HEAD_DIM)
    sf = _mscale_factors(T)
    if sf is not None:
        q = q * sf[:, None, None]
    q = _ref_rope(q, positions)
    k = _ref_rope(k, positions)
    group = NUM_HEADS // NUM_KV_HEADS
    k_r = jnp.repeat(k, group, axis=1)
    v_r = jnp.repeat(v, group, axis=1)
    s = jnp.einsum('thd,shd->hts', q, k_r) * SCALING
    mask = jnp.tril(jnp.ones((T, T), dtype=bool))
    s = jnp.where(mask[None], s, -jnp.inf)
    p = jax.nn.softmax(s, axis=-1)
    o = jnp.einsum('hts,shd->thd', p, v_r).reshape(T, Q_SIZE)
    return o @ w_o


# ----------------------------------- main ------------------------------------
if __name__ == "__main__":
    key = jax.random.PRNGKey(0)
    k_hs, k_qkv, k_o = jax.random.split(key, 3)

    hidden_states = jax.random.normal(k_hs, (SEQ, HIDDEN), dtype=jnp.float32)
    w_qkv = 0.05 * jax.random.normal(
        k_qkv, (HIDDEN, Q_SIZE + 2 * KV_SIZE), dtype=jnp.float32)
    w_o = 0.05 * jax.random.normal(k_o, (Q_SIZE, HIDDEN), dtype=jnp.float32)
    positions = jnp.arange(SEQ, dtype=jnp.int32)

    out = nemotron_attention_forward(positions, hidden_states, w_qkv, w_o)
    out = jax.block_until_ready(out)

    ref = reference(positions, hidden_states, w_qkv, w_o)
    assert out.shape == (SEQ, HIDDEN)
    assert bool(jnp.all(jnp.isfinite(out)))
    # Tolerance slightly relaxed vs f32 exact to accommodate the EUP
    # approximate-reciprocal softmax normalization.
    assert bool(jnp.allclose(out, ref, atol=2e-3, rtol=2e-3)), "mismatch vs reference"

    print("KERNEL_OK")
</pallas_src>

<mosaic_0001>
module attributes {stable_mosaic.version = 11 : i64} {
  func.func @_fused_attn_kernel(%arg0: memref<8x32xf32, #tpu.memory_space<vmem>>, %arg1: memref<32x64xf32, #tpu.memory_space<vmem>>, %arg2: memref<32x32xf32, #tpu.memory_space<vmem>>, %arg3: memref<8x48xf32, #tpu.memory_space<vmem>>, %arg4: memref<8x48xf32, #tpu.memory_space<vmem>>, %arg5: memref<8x48xf32, #tpu.memory_space<vmem>>, %arg6: memref<8x8xf32, #tpu.memory_space<vmem>>, %arg7: memref<8x32xf32, #tpu.memory_space<vmem>>) attributes {dimension_semantics = [], scalar_prefetch = 0 : i64, scratch_operands = 0 : i64, tpu.core_type = #tpu.core_type<tc>} {
    %c0 = arith.constant 0 : index
    %c0_0 = arith.constant 0 : index
    %0 = vector.load %arg0[%c0, %c0_0] : memref<8x32xf32, #tpu.memory_space<vmem>>, vector<8x32xf32>
    %c0_1 = arith.constant 0 : index
    %c0_2 = arith.constant 0 : index
    %1 = vector.load %arg1[%c0_1, %c0_2] : memref<32x64xf32, #tpu.memory_space<vmem>>, vector<32x64xf32>
    %cst = arith.constant dense<0.000000e+00> : vector<8x64xf32>
    %2 = tpu.matmul %0, %1, %cst {dimension_numbers = #tpu.dot_dimension_numbers<[1], [0], [0], [1], [0, 0, 1, 1], [], []>} : vector<8x32xf32>, vector<32x64xf32>, vector<8x64xf32> -> vector<8x64xf32>
    %3 = vector.extract_strided_slice %2 {offsets = [0, 0], sizes = [8, 48], strides = [1, 1]} : vector<8x64xf32> to vector<8x48xf32>
    %4 = vector.extract_strided_slice %2 {offsets = [0, 48], sizes = [8, 16], strides = [1, 1]} : vector<8x64xf32> to vector<8x16xf32>
    %c0_3 = arith.constant 0 : index
    %c0_4 = arith.constant 0 : index
    %5 = vector.load %arg3[%c0_3, %c0_4] : memref<8x48xf32, #tpu.memory_space<vmem>>, vector<8x48xf32>
    %6 = arith.mulf %3, %5 : vector<8x48xf32>
    %7 = vector.extract_strided_slice %3 {offsets = [0, 2], sizes = [8, 46], strides = [1, 1]} : vector<8x48xf32> to vector<8x46xf32>
    %8 = vector.extract_strided_slice %3 {offsets = [0, 0], sizes = [8, 2], strides = [1, 1]} : vector<8x48xf32> to vector<8x2xf32>
    %9 = tpu.concatenate %7, %8 in 1 : vector<8x46xf32>, vector<8x2xf32> -> vector<8x48xf32>
    %c0_5 = arith.constant 0 : index
    %c0_6 = arith.constant 0 : index
    %10 = vector.load %arg4[%c0_5, %c0_6] : memref<8x48xf32, #tpu.memory_space<vmem>>, vector<8x48xf32>
    %11 = arith.mulf %9, %10 : vector<8x48xf32>
    %12 = arith.addf %6, %11 : vector<8x48xf32>
    %13 = vector.extract_strided_slice %3 {offsets = [0, 46], sizes = [8, 2], strides = [1, 1]} : vector<8x48xf32> to vector<8x2xf32>
    %14 = vector.extract_strided_slice %3 {offsets = [0, 0], sizes = [8, 46], strides = [1, 1]} : vector<8x48xf32> to vector<8x46xf32>
    %15 = tpu.concatenate %13, %14 in 1 : vector<8x2xf32>, vector<8x46xf32> -> vector<8x48xf32>
    %c0_7 = arith.constant 0 : index
    %c0_8 = arith.constant 0 : index
    %16 = vector.load %arg5[%c0_7, %c0_8] : memref<8x48xf32, #tpu.memory_space<vmem>>, vector<8x48xf32>
    %17 = arith.mulf %15, %16 : vector<8x48xf32>
    %18 = arith.addf %12, %17 : vector<8x48xf32>
    %19 = vector.extract_strided_slice %18 {offsets = [0, 0], sizes = [8, 32], strides = [1, 1]} : vector<8x48xf32> to vector<8x32xf32>
    %20 = vector.extract_strided_slice %18 {offsets = [0, 32], sizes = [8, 16], strides = [1, 1]} : vector<8x48xf32> to vector<8x16xf32>
    %c0_9 = arith.constant 0 : index
    %c0_10 = arith.constant 0 : index
    %21 = vector.load %arg2[%c0_9, %c0_10] : memref<32x32xf32, #tpu.memory_space<vmem>>, vector<32x32xf32>
    %c0_11 = arith.constant 0 : index
    %c0_12 = arith.constant 0 : index
    %22 = vector.load %arg6[%c0_11, %c0_12] : memref<8x8xf32, #tpu.memory_space<vmem>>, vector<8x8xf32>
    %cst_13 = arith.constant 0.000000e+00 : f32
    %23 = vector.broadcast %cst_13 : f32 to vector<8x32xf32>
    %24 = vector.extract_strided_slice %19 {offsets = [0, 0], sizes = [8, 8], strides = [1, 1]} : vector<8x32xf32> to vector<8x8xf32>
    %25 = vector.extract_strided_slice %20 {offsets = [0, 0], sizes = [8, 8], strides = [1, 1]} : vector<8x16xf32> to vector<8x8xf32>
    %26 = vector.extract_strided_slice %4 {offsets = [0, 0], sizes = [8, 8], strides = [1, 1]} : vector<8x16xf32> to vector<8x8xf32>
    %cst_14 = arith.constant dense<0.000000e+00> : vector<8x8xf32>
    %27 = tpu.matmul %24, %25, %cst_14 {dimension_numbers = #tpu.dot_dimension_numbers<[1], [1], [0], [0], [0, 0, 1, 0], [], []>} : vector<8x8xf32>, vector<8x8xf32>, vector<8x8xf32> -> vector<8x8xf32>
    %28 = arith.addf %27, %22 : vector<8x8xf32>
    %cst_15 = arith.constant dense<0xFF800000> : vector<8xf32>
    %29 = vector.multi_reduction <maximumf>, %28, %cst_15 [1] : vector<8x8xf32> to vector<8xf32>
    %30 = vector.shape_cast %29 : vector<8xf32> to vector<8x1xf32>
    %31 = vector.broadcast %30 : vector<8x1xf32> to vector<8x8xf32>
    %32 = arith.subf %28, %31 : vector<8x8xf32>
    %33 = math.exp %32 : vector<8x8xf32>
    %cst_16 = arith.constant dense<0.000000e+00> : vector<8xf32>
    %34 = vector.multi_reduction <add>, %33, %cst_16 [1] : vector<8x8xf32> to vector<8xf32>
    %35 = vector.shape_cast %34 : vector<8xf32> to vector<8x1xf32>
    %cst_17 = arith.constant dense<0.000000e+00> : vector<8x8xf32>
    %36 = tpu.matmul %33, %26, %cst_17 {dimension_numbers = #tpu.dot_dimension_numbers<[1], [0], [0], [1], [0, 0, 1, 1], [], []>} : vector<8x8xf32>, vector<8x8xf32>, vector<8x8xf32> -> vector<8x8xf32>
    %37 = tpu.reciprocal %35 {approx = true} : vector<8x1xf32> -> vector<8x1xf32>
    %38 = vector.broadcast %37 : vector<8x1xf32> to vector<8x8xf32>
    %39 = arith.mulf %36, %38 : vector<8x8xf32>
    %40 = vector.extract_strided_slice %21 {offsets = [0, 0], sizes = [8, 32], strides = [1, 1]} : vector<32x32xf32> to vector<8x32xf32>
    %cst_18 = arith.constant dense<0.000000e+00> : vector<8x32xf32>
    %41 = tpu.matmul %39, %40, %cst_18 {dimension_numbers = #tpu.dot_dimension_numbers<[1], [0], [0], [1], [0, 0, 1, 1], [], []>} : vector<8x8xf32>, vector<8x32xf32>, vector<8x32xf32> -> vector<8x32xf32>
    %42 = arith.addf %23, %41 : vector<8x32xf32>
    %43 = vector.extract_strided_slice %19 {offsets = [0, 8], sizes = [8, 8], strides = [1, 1]} : vector<8x32xf32> to vector<8x8xf32>
    %44 = vector.extract_strided_slice %20 {offsets = [0, 0], sizes = [8, 8], strides = [1, 1]} : vector<8x16xf32> to vector<8x8xf32>
    %45 = vector.extract_strided_slice %4 {offsets = [0, 0], sizes = [8, 8], strides = [1, 1]} : vector<8x16xf32> to vector<8x8xf32>
    %cst_19 = arith.constant dense<0.000000e+00> : vector<8x8xf32>
    %46 = tpu.matmul %43, %44, %cst_19 {dimension_numbers = #tpu.dot_dimension_numbers<[1], [1], [0], [0], [0, 0, 1, 0], [], []>} : vector<8x8xf32>, vector<8x8xf32>, vector<8x8xf32> -> vector<8x8xf32>
    %47 = arith.addf %46, %22 : vector<8x8xf32>
    %cst_20 = arith.constant dense<0xFF800000> : vector<8xf32>
    %48 = vector.multi_reduction <maximumf>, %47, %cst_20 [1] : vector<8x8xf32> to vector<8xf32>
    %49 = vector.shape_cast %48 : vector<8xf32> to vector<8x1xf32>
    %50 = vector.broadcast %49 : vector<8x1xf32> to vector<8x8xf32>
    %51 = arith.subf %47, %50 : vector<8x8xf32>
    %52 = math.exp %51 : vector<8x8xf32>
    %cst_21 = arith.constant dense<0.000000e+00> : vector<8xf32>
    %53 = vector.multi_reduction <add>, %52, %cst_21 [1] : vector<8x8xf32> to vector<8xf32>
    %54 = vector.shape_cast %53 : vector<8xf32> to vector<8x1xf32>
    %cst_22 = arith.constant dense<0.000000e+00> : vector<8x8xf32>
    %55 = tpu.matmul %52, %45, %cst_22 {dimension_numbers = #tpu.dot_dimension_numbers<[1], [0], [0], [1], [0, 0, 1, 1], [], []>} : vector<8x8xf32>, vector<8x8xf32>, vector<8x8xf32> -> vector<8x8xf32>
    %56 = tpu.reciprocal %54 {approx = true} : vector<8x1xf32> -> vector<8x1xf32>
    %57 = vector.broadcast %56 : vector<8x1xf32> to vector<8x8xf32>
    %58 = arith.mulf %55, %57 : vector<8x8xf32>
    %59 = vector.extract_strided_slice %21 {offsets = [8, 0], sizes = [8, 32], strides = [1, 1]} : vector<32x32xf32> to vector<8x32xf32>
    %cst_23 = arith.constant dense<0.000000e+00> : vector<8x32xf32>
    %60 = tpu.matmul %58, %59, %cst_23 {dimension_numbers = #tpu.dot_dimension_numbers<[1], [0], [0], [1], [0, 0, 1, 1], [], []>} : vector<8x8xf32>, vector<8x32xf32>, vector<8x32xf32> -> vector<8x32xf32>
    %61 = arith.addf %42, %60 : vector<8x32xf32>
    %62 = vector.extract_strided_slice %19 {offsets = [0, 16], sizes = [8, 8], strides = [1, 1]} : vector<8x32xf32> to vector<8x8xf32>
    %63 = vector.extract_strided_slice %20 {offsets = [0, 8], sizes = [8, 8], strides = [1, 1]} : vector<8x16xf32> to vector<8x8xf32>
    %64 = vector.extract_strided_slice %4 {offsets = [0, 8], sizes = [8, 8], strides = [1, 1]} : vector<8x16xf32> to vector<8x8xf32>
    %cst_24 = arith.constant dense<0.000000e+00> : vector<8x8xf32>
    %65 = tpu.matmul %62, %63, %cst_24 {dimension_numbers = #tpu.dot_dimension_numbers<[1], [1], [0], [0], [0, 0, 1, 0], [], []>} : vector<8x8xf32>, vector<8x8xf32>, vector<8x8xf32> -> vector<8x8xf32>
    %66 = arith.addf %65, %22 : vector<8x8xf32>
    %cst_25 = arith.constant dense<0xFF800000> : vector<8xf32>
    %67 = vector.multi_reduction <maximumf>, %66, %cst_25 [1] : vector<8x8xf32> to vector<8xf32>
    %68 = vector.shape_cast %67 : vector<8xf32> to vector<8x1xf32>
    %69 = vector.broadcast %68 : vector<8x1xf32> to vector<8x8xf32>
    %70 = arith.subf %66, %69 : vector<8x8xf32>
    %71 = math.exp %70 : vector<8x8xf32>
    %cst_26 = arith.constant dense<0.000000e+00> : vector<8xf32>
    %72 = vector.multi_reduction <add>, %71, %cst_26 [1] : vector<8x8xf32> to vector<8xf32>
    %73 = vector.shape_cast %72 : vector<8xf32> to vector<8x1xf32>
    %cst_27 = arith.constant dense<0.000000e+00> : vector<8x8xf32>
    %74 = tpu.matmul %71, %64, %cst_27 {dimension_numbers = #tpu.dot_dimension_numbers<[1], [0], [0], [1], [0, 0, 1, 1], [], []>} : vector<8x8xf32>, vector<8x8xf32>, vector<8x8xf32> -> vector<8x8xf32>
    %75 = tpu.reciprocal %73 {approx = true} : vector<8x1xf32> -> vector<8x1xf32>
    %76 = vector.broadcast %75 : vector<8x1xf32> to vector<8x8xf32>
    %77 = arith.mulf %74, %76 : vector<8x8xf32>
    %78 = vector.extract_strided_slice %21 {offsets = [16, 0], sizes = [8, 32], strides = [1, 1]} : vector<32x32xf32> to vector<8x32xf32>
    %cst_28 = arith.constant dense<0.000000e+00> : vector<8x32xf32>
    %79 = tpu.matmul %77, %78, %cst_28 {dimension_numbers = #tpu.dot_dimension_numbers<[1], [0], [0], [1], [0, 0, 1, 1], [], []>} : vector<8x8xf32>, vector<8x32xf32>, vector<8x32xf32> -> vector<8x32xf32>
    %80 = arith.addf %61, %79 : vector<8x32xf32>
    %81 = vector.extract_strided_slice %19 {offsets = [0, 24], sizes = [8, 8], strides = [1, 1]} : vector<8x32xf32> to vector<8x8xf32>
    %82 = vector.extract_strided_slice %20 {offsets = [0, 8], sizes = [8, 8], strides = [1, 1]} : vector<8x16xf32> to vector<8x8xf32>
    %83 = vector.extract_strided_slice %4 {offsets = [0, 8], sizes = [8, 8], strides = [1, 1]} : vector<8x16xf32> to vector<8x8xf32>
    %cst_29 = arith.constant dense<0.000000e+00> : vector<8x8xf32>
    %84 = tpu.matmul %81, %82, %cst_29 {dimension_numbers = #tpu.dot_dimension_numbers<[1], [1], [0], [0], [0, 0, 1, 0], [], []>} : vector<8x8xf32>, vector<8x8xf32>, vector<8x8xf32> -> vector<8x8xf32>
    %85 = arith.addf %84, %22 : vector<8x8xf32>
    %cst_30 = arith.constant dense<0xFF800000> : vector<8xf32>
    %86 = vector.multi_reduction <maximumf>, %85, %cst_30 [1] : vector<8x8xf32> to vector<8xf32>
    %87 = vector.shape_cast %86 : vector<8xf32> to vector<8x1xf32>
    %88 = vector.broadcast %87 : vector<8x1xf32> to vector<8x8xf32>
    %89 = arith.subf %85, %88 : vector<8x8xf32>
    %90 = math.exp %89 : vector<8x8xf32>
    %cst_31 = arith.constant dense<0.000000e+00> : vector<8xf32>
    %91 = vector.multi_reduction <add>, %90, %cst_31 [1] : vector<8x8xf32> to vector<8xf32>
    %92 = vector.shape_cast %91 : vector<8xf32> to vector<8x1xf32>
    %cst_32 = arith.constant dense<0.000000e+00> : vector<8x8xf32>
    %93 = tpu.matmul %90, %83, %cst_32 {dimension_numbers = #tpu.dot_dimension_numbers<[1], [0], [0], [1], [0, 0, 1, 1], [], []>} : vector<8x8xf32>, vector<8x8xf32>, vector<8x8xf32> -> vector<8x8xf32>
    %94 = tpu.reciprocal %92 {approx = true} : vector<8x1xf32> -> vector<8x1xf32>
    %95 = vector.broadcast %94 : vector<8x1xf32> to vector<8x8xf32>
    %96 = arith.mulf %93, %95 : vector<8x8xf32>
    %97 = vector.extract_strided_slice %21 {offsets = [24, 0], sizes = [8, 32], strides = [1, 1]} : vector<32x32xf32> to vector<8x32xf32>
    %cst_33 = arith.constant dense<0.000000e+00> : vector<8x32xf32>
    %98 = tpu.matmul %96, %97, %cst_33 {dimension_numbers = #tpu.dot_dimension_numbers<[1], [0], [0], [1], [0, 0, 1, 1], [], []>} : vector<8x8xf32>, vector<8x32xf32>, vector<8x32xf32> -> vector<8x32xf32>
    %99 = arith.addf %80, %98 : vector<8x32xf32>
    %c0_34 = arith.constant 0 : index
    %c0_35 = arith.constant 0 : index
    %100 = vector.load %arg7[%c0_34, %c0_35] : memref<8x32xf32, #tpu.memory_space<vmem>>, vector<8x32xf32>
    tpu.vector_store %arg7[%c0_34, %c0_35], %99 {strides = array<i32>} : memref<8x32xf32, #tpu.memory_space<vmem>>, vector<8x32xf32>,
    return
  }
}

</mosaic_0001>

<llo_original>
// kernel: nemotron_attention_forward.1
$region0: #{nemotron_attention_forward.1}
  #allocation0 [shape = 'u32[]', space=smem, size = 0x4, offset = 0x4, fixed_abs, tag = 'smem constant byte address 0x4 - core index']
  #allocation1 [shape = 'u32[72,128]{1,0:T(1,128)}', space=vmem, size = 0x9000, scoped, tag = 'internal scratch']
  %s0 = inlined_call_operand.vmem [shape: f32[8,32], index: 0, kind: input, shape index: {}]
  %s1 = inlined_call_operand.vmem [shape: f32[32,64], index: 1, kind: input, shape index: {}]
  %s2 = inlined_call_operand.vmem [shape: f32[32,32], index: 2, kind: input, shape index: {}]
  %s3 = inlined_call_operand.vmem [shape: f32[8,48], index: 3, kind: input, shape index: {}]
  %s4 = inlined_call_operand.vmem [shape: f32[8,48], index: 4, kind: input, shape index: {}]
  %s5 = inlined_call_operand.vmem [shape: f32[8,48], index: 5, kind: input, shape index: {}]
  %s6 = inlined_call_operand.vmem [shape: f32[8,8], index: 6, kind: input, shape index: {}]
  %s7 = inlined_call_operand.hbm [shape: f32[8,32], index: 7, kind: output, shape index: {}]
  %s8 = sld [smem:[#allocation0]]
  $region38: #{nemotron_attention_forward.1} parent=0
    _
  %s10 = ssub.s32 1, %s8
  %s11 = scalar_select 0, %s10, %s8
  $region1: #{nemotron_attention_forward.1} parent=0
    #allocation2 [shape = 'u8[4096]{0}', space=vmem, size = 0x1000, scoped, tag = 'output window, operand 0, single buffered']
    #allocation3 [shape = 's32[1]{0}', space=sflag, size = 0x4, scoped, tag = 'scoped memory for nemotron_attention_forward.1']
    %12 = vsyncpa [#allocation3], 0
    // Predicated region
    $region2: #{nemotron_attention_forward.1} parent=1 // pred_check
      _
    $region3: #{nemotron_attention_forward.1} parent=1 // pred_check_branch
      %14 = sbr.rel (0) target = $region5
    $region4: #{nemotron_attention_forward.1} parent=1 // pred_region
      _
    $region5: #{nemotron_attention_forward.1} parent=1 // pred_fallthru
      _
    // Predicated region
    $region6: #{nemotron_attention_forward.1} parent=1 // pred_check
      _
    $region7: #{nemotron_attention_forward.1} parent=1 // pred_check_branch
      %16 = sbr.rel (0) target = $region9
    $region8: #{nemotron_attention_forward.1} parent=1 // pred_region
      _
    $region9: #{nemotron_attention_forward.1} parent=1 // pred_fallthru
      _
    // Predicated region
    $region10: #{nemotron_attention_forward.1} parent=1 // pred_check
      _
    $region11: #{nemotron_attention_forward.1} parent=1 // pred_check_branch
      %18 = sbr.rel (0) target = $region13
    $region12: #{nemotron_attention_forward.1} parent=1 // pred_region
      _
    $region13: #{nemotron_attention_forward.1} parent=1 // pred_fallthru
      _
    // Predicated region
    $region14: #{nemotron_attention_forward.1} parent=1 // pred_check
      _
    $region15: #{nemotron_attention_forward.1} parent=1 // pred_check_branch
      %20 = sbr.rel (0) target = $region17
    $region16: #{nemotron_attention_forward.1} parent=1 // pred_region
      _
    $region17: #{nemotron_attention_forward.1} parent=1 // pred_fallthru
      _
    // Predicated region
    $region18: #{nemotron_attention_forward.1} parent=1 // pred_check
      _
    $region19: #{nemotron_attention_forward.1} parent=1 // pred_check_branch
      %22 = sbr.rel (0) target = $region21
    $region20: #{nemotron_attention_forward.1} parent=1 // pred_region
      _
    $region21: #{nemotron_attention_forward.1} parent=1 // pred_fallthru
      _
    // Predicated region
    $region22: #{nemotron_attention_forward.1} parent=1 // pred_check
      _
    $region23: #{nemotron_attention_forward.1} parent=1 // pred_check_branch
      %24 = sbr.rel (0) target = $region25
    $region24: #{nemotron_attention_forward.1} parent=1 // pred_region
      _
    $region25: #{nemotron_attention_forward.1} parent=1 // pred_fallthru
      _
    // Predicated region
    $region26: #{nemotron_attention_forward.1} parent=1 // pred_check
      _
    $region27: #{nemotron_attention_forward.1} parent=1 // pred_check_branch
      %26 = sbr.rel (0) target = $region29
    $region28: #{nemotron_attention_forward.1} parent=1 // pred_region
      _
    $region29: #{nemotron_attention_forward.1} parent=1 // pred_fallthru
      _
    %v27 = vld [vmem:[%s0] sm:$0xff]
    %v28 = vld [vmem:[%s1] sm:$0xff]
    %v29 = vld [vmem:[%s1 + $0x8] sm:$0xff]
    %v30 = vld [vmem:[%s1 + $0x10] sm:$0xff]
    %v31 = vld [vmem:[%s1 + $0x18] sm:$0xff]
    %vm32 = vcmask 261120
    %v34 = vsel %vm32, %v27, 0
    %36 = vmatpush.msra.mxu0 0.0
    %37 = vmatpush.msra.mxu0 0.0
    %38 = vmatpush.msra.mxu0 0.0
    %39 = vmatpush.msra.mxu0 0.0
    %40 = vmatpush.msra.mxu0 0.0
    %41 = vmatpush.msra.mxu0 0.0
    %42 = vmatpush.msra.mxu0 0.0
    %43 = vmatpush.msra.mxu0 0.0
    %44 = vmatpush.msra.mxu0 0.0
    %45 = vmatpush.msra.mxu0 0.0
    %46 = vmatpush.msra.mxu0 0.0
    %47 = vmatpush.msra.mxu0 0.0
    %48 = vmatpush.msra.mxu0 %v31
    %49 = vmatpush.msra.mxu0 %v30
    %50 = vmatpush.msra.mxu0 %v29
    %51 = vmatpush.msra.mxu0 %v28
    %52 = vmatmul.f32.gmra.mxu0 %v34
    %v53 = vpop.f32.mrf.mxu0
    %v54 = vadd.f32 0.0, %v53
    %55 = vdwg.mxu0
    %v56 = vld [vmem:[%s3] sm:$0xff]
    %v57 = vmul.f32 %v54, %v56
    %59 = vrot.lane.b32.xlu0 %v54, 126
    %v60 = vpop.permute.xlu0 %59
    %62 = vrot.lane.b32.xlu0 %v54, 46
    %v63 = vpop.permute.xlu0 %62
    %vm65 = vcmask 375808
    %v66 = vsel %vm65, %v60, %v63
    %v67 = vld [vmem:[%s4] sm:$0xff]
    %v68 = vmul.f32 %v66, %v67
    %v69 = vadd.f32 %v57, %v68
    %70 = vrot.lane.b32.xlu0 %v54, 82
    %v71 = vpop.permute.xlu0 %70
    %73 = vrot.lane.b32.xlu0 %v54, 2
    %v74 = vpop.permute.xlu0 %73
    %vm76 = vcmask 15360
    %v77 = vsel %vm76, %v71, %v74
    %v78 = vld [vmem:[%s5] sm:$0xff]
    %v79 = vmul.f32 %v77, %v78
    %v80 = vadd.f32 %v69, %v79
    %v81 = vld [vmem:[%s2] sm:$0xff]
    %v82 = vld [vmem:[%s2 + $0x8] sm:$0xff]
    %v83 = vld [vmem:[%s2 + $0x10] sm:$0xff]
    %v84 = vld [vmem:[%s2 + $0x18] sm:$0xff]
    %v85 = vld [vmem:[%s6] sm:$0xff]
    %87 = vrot.lane.b32.xlu0 %v80, 96
    %v88 = vpop.permute.xlu0 %87
    %vm89 = vcmask 64512
    %v90 = vsel %vm89, %v80, 0
    %v92 = vsel %vm89, %v88, 0
    %94 = vmatpush.xpose.msra.mxu0 0.0
    %95 = vmatpush.xpose.msra.mxu0 0.0
    %96 = vmatpush.xpose.msra.mxu0 0.0
    %97 = vmatpush.xpose.msra.mxu0 0.0
    %98 = vmatpush.xpose.msra.mxu0 0.0
    %99 = vmatpush.xpose.msra.mxu0 0.0
    %100 = vmatpush.xpose.msra.mxu0 0.0
    %101 = vmatpush.xpose.msra.mxu0 0.0
    %102 = vmatpush.xpose.msra.mxu0 0.0
    %103 = vmatpush.xpose.msra.mxu0 0.0
    %104 = vmatpush.xpose.msra.mxu0 0.0
    %105 = vmatpush.xpose.msra.mxu0 0.0
    %106 = vmatpush.xpose.msra.mxu0 0.0
    %107 = vmatpush.xpose.msra.mxu0 0.0
    %108 = vmatpush.xpose.msra.mxu0 0.0
    %109 = vmatpush.xpose.msra.mxu0 %v92
    %110 = vmatmul.f32.gmra.mxu0 %v90
    %v111 = vpop.f32.mrf.mxu0
    %v112 = vadd.f32 %v85, %v111
    %113 = vdwg.mxu0
    %v114 = vsel %vm89, %v112, -inf
    %115 = vmax.xlane.f32.xlu0 %v114
    %v116 = vpop.xlane.xlu0 %115
    %v117 = vsub.f32 %v112, %v116
    %v118 = vmul.f32 %v117, 1.442695
    %v119 = vpow.pop %v118
    %v120 = vsel %vm89, %v119, 0.0
    %121 = vadd.xlane.f32.xlu0 %v120
    %v122 = vpop.xlane.xlu0 %121
    %123 = vrot.lane.b32.xlu0 %v54, 80
    %v124 = vpop.permute.xlu0 %123
    %v127 = vsel %vm89, %v119, 0
    %129 = vmatpush.msra.mxu0 0.0
    %130 = vmatpush.msra.mxu0 0.0
    %131 = vmatpush.msra.mxu0 0.0
    %132 = vmatpush.msra.mxu0 0.0
    %133 = vmatpush.msra.mxu0 0.0
    %134 = vmatpush.msra.mxu0 0.0
    %135 = vmatpush.msra.mxu0 0.0
    %136 = vmatpush.msra.mxu0 0.0
    %137 = vmatpush.msra.mxu0 0.0
    %138 = vmatpush.msra.mxu0 0.0
    %139 = vmatpush.msra.mxu0 0.0
    %140 = vmatpush.msra.mxu0 0.0
    %141 = vmatpush.msra.mxu0 0.0
    %142 = vmatpush.msra.mxu0 0.0
    %143 = vmatpush.msra.mxu0 0.0
    %144 = vmatpush.msra.mxu0 %v124
    %145 = vmatmul.f32.gmra.mxu0 %v127
    %v146 = vpop.f32.mrf.mxu0
    %v147 = vadd.f32 0.0, %v146
    %148 = vdwg.mxu0
    %v149 = vrcp.pop %v122
    %v150 = vmul.f32 %v147, %v149
    %151 = vrot.lane.b32.xlu0 %v80, 120
    %v152 = vpop.permute.xlu0 %151
    %v153 = vsel %vm89, %v152, 0
    %155 = vmatpush.xpose.msra.mxu0 0.0
    %156 = vmatpush.xpose.msra.mxu0 0.0
    %157 = vmatpush.xpose.msra.mxu0 0.0
    %158 = vmatpush.xpose.msra.mxu0 0.0
    %159 = vmatpush.xpose.msra.mxu0 0.0
    %160 = vmatpush.xpose.msra.mxu0 0.0
    %161 = vmatpush.xpose.msra.mxu0 0.0
    %162 = vmatpush.xpose.msra.mxu0 0.0
    %163 = vmatpush.xpose.msra.mxu0 0.0
    %164 = vmatpush.xpose.msra.mxu0 0.0
    %165 = vmatpush.xpose.msra.mxu0 0.0
    %166 = vmatpush.xpose.msra.mxu0 0.0
    %167 = vmatpush.xpose.msra.mxu0 0.0
    %168 = vmatpush.xpose.msra.mxu0 0.0
    %169 = vmatpush.xpose.msra.mxu0 0.0
    %170 = vmatpush.xpose.msra.mxu0 %v92
    %171 = vmatmul.f32.gmra.mxu0 %v153
    %v172 = vpop.f32.mrf.mxu0
    %v173 = vadd.f32 %v85, %v172
    %174 = vdwg.mxu0
    %v175 = vsel %vm89, %v173, -inf
    %176 = vmax.xlane.f32.xlu0 %v175
    %v177 = vpop.xlane.xlu0 %176
    %v178 = vsub.f32 %v173, %v177
    %v179 = vmul.f32 %v178, 1.442695
    %v180 = vpow.pop %v179
    %v181 = vsel %vm89, %v180, 0.0
    %182 = vadd.xlane.f32.xlu0 %v181
    %v183 = vpop.xlane.xlu0 %182
    %v185 = vsel %vm89, %v180, 0
    %187 = vmatpush.msra.mxu0 0.0
    %188 = vmatpush.msra.mxu0 0.0
    %189 = vmatpush.msra.mxu0 0.0
    %190 = vmatpush.msra.mxu0 0.0
    %191 = vmatpush.msra.mxu0 0.0
    %192 = vmatpush.msra.mxu0 0.0
    %193 = vmatpush.msra.mxu0 0.0
    %194 = vmatpush.msra.mxu0 0.0
    %195 = vmatpush.msra.mxu0 0.0
    %196 = vmatpush.msra.mxu0 0.0
    %197 = vmatpush.msra.mxu0 0.0
    %198 = vmatpush.msra.mxu0 0.0
    %199 = vmatpush.msra.mxu0 0.0
    %200 = vmatpush.msra.mxu0 0.0
    %201 = vmatpush.msra.mxu0 0.0
    %202 = vmatpush.msra.mxu0 %v124
    %203 = vmatmul.f32.gmra.mxu0 %v185
    %v204 = vpop.f32.mrf.mxu0
    %v205 = vadd.f32 0.0, %v204
    %206 = vdwg.mxu0
    %v207 = vrcp.pop %v183
    %v208 = vmul.f32 %v205, %v207
    %v210 = vsel %vm89, %v208, 0
    %212 = vmatpush.msra.mxu0 0.0
    %213 = vmatpush.msra.mxu0 0.0
    %214 = vmatpush.msra.mxu0 0.0
    %215 = vmatpush.msra.mxu0 0.0
    %216 = vmatpush.msra.mxu0 0.0
    %217 = vmatpush.msra.mxu0 0.0
    %218 = vmatpush.msra.mxu0 0.0
    %219 = vmatpush.msra.mxu0 0.0
    %220 = vmatpush.msra.mxu0 0.0
    %221 = vmatpush.msra.mxu0 0.0
    %222 = vmatpush.msra.mxu0 0.0
    %223 = vmatpush.msra.mxu0 0.0
    %224 = vmatpush.msra.mxu0 0.0
    %225 = vmatpush.msra.mxu0 0.0
    %226 = vmatpush.msra.mxu0 0.0
    %227 = vmatpush.msra.mxu0 %v82
    %228 = vmatmul.f32.gmra.mxu0 %v210
    %v229 = vpop.f32.mrf.mxu0
    %v230 = vadd.f32 0.0, %v229
    %231 = vdwg.mxu0
    %v233 = vsel %vm89, %v150, 0
    %235 = vmatpush.msra.mxu0 0.0
    %236 = vmatpush.msra.mxu0 0.0
    %237 = vmatpush.msra.mxu0 0.0
    %238 = vmatpush.msra.mxu0 0.0
    %239 = vmatpush.msra.mxu0 0.0
    %240 = vmatpush.msra.mxu0 0.0
    %241 = vmatpush.msra.mxu0 0.0
    %242 = vmatpush.msra.mxu0 0.0
    %243 = vmatpush.msra.mxu0 0.0
    %244 = vmatpush.msra.mxu0 0.0
    %245 = vmatpush.msra.mxu0 0.0
    %246 = vmatpush.msra.mxu0 0.0
    %247 = vmatpush.msra.mxu0 0.0
    %248 = vmatpush.msra.mxu0 0.0
    %249 = vmatpush.msra.mxu0 0.0
    %250 = vmatpush.msra.mxu0 %v81
    %251 = vmatmul.f32.gmra.mxu0 %v233
    %v252 = vpop.f32.mrf.mxu0
    %v253 = vadd.f32 %v230, %v252
    %254 = vdwg.mxu0
    %255 = vrot.lane.b32.xlu0 %v80, 112
    %v256 = vpop.permute.xlu0 %255
    %257 = vrot.lane.b32.xlu0 %v80, 88
    %v258 = vpop.permute.xlu0 %257
    %v259 = vsel %vm89, %v256, 0
    %v261 = vsel %vm89, %v258, 0
    %263 = vmatpush.xpose.msra.mxu0 0.0
    %264 = vmatpush.xpose.msra.mxu0 0.0
    %265 = vmatpush.xpose.msra.mxu0 0.0
    %266 = vmatpush.xpose.msra.mxu0 0.0
    %267 = vmatpush.xpose.msra.mxu0 0.0
    %268 = vmatpush.xpose.msra.mxu0 0.0
    %269 = vmatpush.xpose.msra.mxu0 0.0
    %270 = vmatpush.xpose.msra.mxu0 0.0
    %271 = vmatpush.xpose.msra.mxu0 0.0
    %272 = vmatpush.xpose.msra.mxu0 0.0
    %273 = vmatpush.xpose.msra.mxu0 0.0
    %274 = vmatpush.xpose.msra.mxu0 0.0
    %275 = vmatpush.xpose.msra.mxu0 0.0
    %276 = vmatpush.xpose.msra.mxu0 0.0
    %277 = vmatpush.xpose.msra.mxu0 0.0
    %278 = vmatpush.xpose.msra.mxu0 %v261
    %279 = vmatmul.f32.gmra.mxu0 %v259
    %v280 = vpop.f32.mrf.mxu0
    %v281 = vadd.f32 %v85, %v280
    %282 = vdwg.mxu0
    %v283 = vsel %vm89, %v281, -inf
    %284 = vmax.xlane.f32.xlu0 %v283
    %v285 = vpop.xlane.xlu0 %284
    %v286 = vsub.f32 %v281, %v285
    %v287 = vmul.f32 %v286, 1.442695
    %v288 = vpow.pop %v287
    %v289 = vsel %vm89, %v288, 0.0
    %290 = vadd.xlane.f32.xlu0 %v289
    %v291 = vpop.xlane.xlu0 %290
    %292 = vrot.lane.b32.xlu0 %v54, 72
    %v293 = vpop.permute.xlu0 %292
    %v296 = vsel %vm89, %v288, 0
    %298 = vmatpush.msra.mxu0 0.0
    %299 = vmatpush.msra.mxu0 0.0
    %300 = vmatpush.msra.mxu0 0.0
    %301 = vmatpush.msra.mxu0 0.0
    %302 = vmatpush.msra.mxu0 0.0
    %303 = vmatpush.msra.mxu0 0.0
    %304 = vmatpush.msra.mxu0 0.0
    %305 = vmatpush.msra.mxu0 0.0
    %306 = vmatpush.msra.mxu0 0.0
    %307 = vmatpush.msra.mxu0 0.0
    %308 = vmatpush.msra.mxu0 0.0
    %309 = vmatpush.msra.mxu0 0.0
    %310 = vmatpush.msra.mxu0 0.0
    %311 = vmatpush.msra.mxu0 0.0
    %312 = vmatpush.msra.mxu0 0.0
    %313 = vmatpush.msra.mxu0 %v293
    %314 = vmatmul.f32.gmra.mxu0 %v296
    %v315 = vpop.f32.mrf.mxu0
    %v316 = vadd.f32 0.0, %v315
    %317 = vdwg.mxu0
    %v318 = vrcp.pop %v291
    %v319 = vmul.f32 %v316, %v318
    %v321 = vsel %vm89, %v319, 0
    %323 = vmatpush.msra.mxu0 0.0
    %324 = vmatpush.msra.mxu0 0.0
    %325 = vmatpush.msra.mxu0 0.0
    %326 = vmatpush.msra.mxu0 0.0
    %327 = vmatpush.msra.mxu0 0.0
    %328 = vmatpush.msra.mxu0 0.0
    %329 = vmatpush.msra.mxu0 0.0
    %330 = vmatpush.msra.mxu0 0.0
    %331 = vmatpush.msra.mxu0 0.0
    %332 = vmatpush.msra.mxu0 0.0
    %333 = vmatpush.msra.mxu0 0.0
    %334 = vmatpush.msra.mxu0 0.0
    %335 = vmatpush.msra.mxu0 0.0
    %336 = vmatpush.msra.mxu0 0.0
    %337 = vmatpush.msra.mxu0 0.0
    %338 = vmatpush.msra.mxu0 %v83
    %339 = vmatmul.f32.gmra.mxu0 %v321
    %v340 = vpop.f32.mrf.mxu0
    %v341 = vadd.f32 0.0, %v340
    %342 = vdwg.mxu0
    %v343 = vadd.f32 %v253, %v341
    %344 = vrot.lane.b32.xlu0 %v80, 104
    %v345 = vpop.permute.xlu0 %344
    %v346 = vsel %vm89, %v345, 0
    %348 = vmatpush.xpose.msra.mxu0 0.0
    %349 = vmatpush.xpose.msra.mxu0 0.0
    %350 = vmatpush.xpose.msra.mxu0 0.0
    %351 = vmatpush.xpose.msra.mxu0 0.0
    %352 = vmatpush.xpose.msra.mxu0 0.0
    %353 = vmatpush.xpose.msra.mxu0 0.0
    %354 = vmatpush.xpose.msra.mxu0 0.0
    %355 = vmatpush.xpose.msra.mxu0 0.0
    %356 = vmatpush.xpose.msra.mxu0 0.0
    %357 = vmatpush.xpose.msra.mxu0 0.0
    %358 = vmatpush.xpose.msra.mxu0 0.0
    %359 = vmatpush.xpose.msra.mxu0 0.0
    %360 = vmatpush.xpose.msra.mxu0 0.0
    %361 = vmatpush.xpose.msra.mxu0 0.0
    %362 = vmatpush.xpose.msra.mxu0 0.0
    %363 = vmatpush.xpose.msra.mxu0 %v261
    %364 = vmatmul.f32.gmra.mxu0 %v346
    %v365 = vpop.f32.mrf.mxu0
    %v366 = vadd.f32 %v85, %v365
    %367 = vdwg.mxu0
    %v368 = vsel %vm89, %v366, -inf
    %369 = vmax.xlane.f32.xlu0 %v368
    %v370 = vpop.xlane.xlu0 %369
    %v371 = vsub.f32 %v366, %v370
    %v372 = vmul.f32 %v371, 1.442695
    %v373 = vpow.pop %v372
    %v374 = vsel %vm89, %v373, 0.0
    %375 = vadd.xlane.f32.xlu0 %v374
    %v376 = vpop.xlane.xlu0 %375
    %v378 = vsel %vm89, %v373, 0
    %380 = vmatpush.msra.mxu0 0.0
    %381 = vmatpush.msra.mxu0 0.0
    %382 = vmatpush.msra.mxu0 0.0
    %383 = vmatpush.msra.mxu0 0.0
    %384 = vmatpush.msra.mxu0 0.0
    %385 = vmatpush.msra.mxu0 0.0
    %386 = vmatpush.msra.mxu0 0.0
    %387 = vmatpush.msra.mxu0 0.0
    %388 = vmatpush.msra.mxu0 0.0
    %389 = vmatpush.msra.mxu0 0.0
    %390 = vmatpush.msra.mxu0 0.0
    %391 = vmatpush.msra.mxu0 0.0
    %392 = vmatpush.msra.mxu0 0.0
    %393 = vmatpush.msra.mxu0 0.0
    %394 = vmatpush.msra.mxu0 0.0
    %395 = vmatpush.msra.mxu0 %v293
    %396 = vmatmul.f32.gmra.mxu0 %v378
    %v397 = vpop.f32.mrf.mxu0
    %v398 = vadd.f32 0.0, %v397
    %399 = vdwg.mxu0
    %v400 = vrcp.pop %v376
    %v401 = vmul.f32 %v398, %v400
    %v403 = vsel %vm89, %v401, 0
    %405 = vmatpush.msra.mxu0 0.0
    %406 = vmatpush.msra.mxu0 0.0
    %407 = vmatpush.msra.mxu0 0.0
    %408 = vmatpush.msra.mxu0 0.0
    %409 = vmatpush.msra.mxu0 0.0
    %410 = vmatpush.msra.mxu0 0.0
    %411 = vmatpush.msra.mxu0 0.0
    %412 = vmatpush.msra.mxu0 0.0
    %413 = vmatpush.msra.mxu0 0.0
    %414 = vmatpush.msra.mxu0 0.0
    %415 = vmatpush.msra.mxu0 0.0
    %416 = vmatpush.msra.mxu0 0.0
    %417 = vmatpush.msra.mxu0 0.0
    %418 = vmatpush.msra.mxu0 0.0
    %419 = vmatpush.msra.mxu0 0.0
    %420 = vmatpush.msra.mxu0 %v84
    %421 = vmatmul.f32.gmra.mxu0 %v403
    %v422 = vpop.f32.mrf.mxu0
    %v423 = vadd.f32 0.0, %v422
    %424 = vdwg.mxu0
    %v425 = vadd.f32 %v343, %v423
    %426 = vst.msk [vmem:[#allocation2] sm:$0xff] %vm32, %v425
    // Predicated region
    $region30: #{nemotron_attention_forward.1} parent=1 // pred_check
      _
    $region31: #{nemotron_attention_forward.1} parent=1 // pred_check_branch
      %428 = sbr.rel (0) target = $region33
    $region32: #{nemotron_attention_forward.1} parent=1 // pred_region
      %430 = vsyncadd [#allocation3], 0
      %s432 = sshll.u32 [#allocation2], 4
      %s433 = int_to_ptr.vmem [resolvable:$true] %s432
      %s434 = sshll.u32 %s7, 4
      %s435 = int_to_ptr.hbm [resolvable:$true] %s434
      %437 = dma.vmem_to_hbm [thread:$0]  %s433, 128, %s435, [#allocation3]
    $region33: #{nemotron_attention_forward.1} parent=1 // pred_fallthru
      _
    // Predicated region
    $region34: #{nemotron_attention_forward.1} parent=1 // pred_check
      _
    $region35: #{nemotron_attention_forward.1} parent=1 // pred_check_branch
      %439 = sbr.rel (0) target = $region37
    $region36: #{nemotron_attention_forward.1} parent=1 // pred_region
      %441 = dma.done [#allocation3], 128
    $region37: #{nemotron_attention_forward.1} parent=1 // pred_fallthru
      _
    %442 = vsyncpa [#allocation3], 1

</llo_original>
